<compile_context>
chip_gen: v7x
topology: tpu7x:2x2x1
jax: 0.10.0
libtpu: 0.0.40
codegen_flags: <defaults>
</compile_context>

<pallas_src>
import jax
import jax.numpy as jnp
from jax import lax
from jax.experimental import pallas as pl
from jax.experimental.pallas import tpu as pltpu


def _round_up(x, m):
    return (x + m - 1) // m * m


def _make_kernel(LT, L_total, has_downsample, compute_dtype):
    """Build the kernel body for one (batch, length-tile) grid step."""

    def body(xa_ref, xb_ref, w1_ref, w2_ref, wd_ref, shift_ref, o_ref, xwin_ref):
        l = pl.program_id(1)

        # Stage main LT-row block + 8-row halo block into one contiguous VMEM window.
        xwin_ref[0:LT, :] = xa_ref[0]
        xwin_ref[LT:LT + 8, :] = xb_ref[0]
        xw = xwin_ref[...]                                    # (LT+8, C_in_p), compute_dtype

        # ---- conv1 (+ folded BN1) over LT+2 halo positions: 3 shifted MXU matmuls ----
        h = (jnp.dot(xw[0:LT + 2], w1_ref[0], preferred_element_type=jnp.float32)
             + jnp.dot(xw[1:LT + 3], w1_ref[1], preferred_element_type=jnp.float32)
             + jnp.dot(xw[2:LT + 4], w1_ref[2], preferred_element_type=jnp.float32))
        h = jnp.maximum(h + shift_ref[0:1, :], 0.0)           # bias+BN folded into one shift

        # Zero rows that fall outside the real sequence: realizes conv2's zero padding at
        # the global boundaries and masks the tail of a ragged last tile.
        row = lax.broadcasted_iota(jnp.int32, (LT + 2, 1), 0)
        gpos = l * LT - 1 + row
        h = jnp.where((gpos >= 0) & (gpos < L_total), h, 0.0)
        hb = h.astype(compute_dtype)

        # ---- conv2 (+ folded BN2): 3 shifted MXU matmuls on the in-register halo h ----
        y = (jnp.dot(hb[0:LT], w2_ref[0], preferred_element_type=jnp.float32)
             + jnp.dot(hb[1:LT + 1], w2_ref[1], preferred_element_type=jnp.float32)
             + jnp.dot(hb[2:LT + 2], w2_ref[2], preferred_element_type=jnp.float32))
        y = y + shift_ref[1:2, :]

        # ---- residual path ----
        if has_downsample:                                    # 1x1 conv (+ folded BNd)
            ident = jnp.dot(xw[2:LT + 2], wd_ref[...],
                            preferred_element_type=jnp.float32) + shift_ref[2:3, :]
        else:                                                 # plain pass-through add
            ident = xw[2:LT + 2].astype(jnp.float32)

        o_ref[0] = jnp.maximum(y + ident, 0.0).astype(o_ref.dtype)

    if has_downsample:
        def kernel(xa_ref, xb_ref, w1_ref, w2_ref, wd_ref, shift_ref, o_ref, xwin_ref):
            body(xa_ref, xb_ref, w1_ref, w2_ref, wd_ref, shift_ref, o_ref, xwin_ref)
    else:
        def kernel(xa_ref, xb_ref, w1_ref, w2_ref, shift_ref, o_ref, xwin_ref):
            body(xa_ref, xb_ref, w1_ref, w2_ref, None, shift_ref, o_ref, xwin_ref)
    return kernel


def _fold_bn(gamma, beta, mean, var, eps=1e-5):
    scale = gamma / jnp.sqrt(var + eps)
    shift = beta - mean * scale
    return scale, shift                                       # both (C_out,)


def convolution_block(x_ncl, params, *, l_tile=512, compute_dtype=jnp.bfloat16, eps=1e-5):
    """x_ncl: (N, C_in, L) float32 in PyTorch Conv1d layout. Returns (N, C_out, L) float32."""
    N, C_in, L = x_ncl.shape
    C_out = params["w1"].shape[0]
    C_in_p = _round_up(C_in, 128)                             # lane-dense channels
    C_out_p = _round_up(C_out, 128)
    LT = min(_round_up(l_tile, 8), _round_up(L, 8))           # length tile (multiple of 8)
    nLT = -(-L // LT)
    L_pad = nLT * LT

    # ---- fold BN (eval-mode) into conv weights + a single per-channel shift ----
    s1, t1 = _fold_bn(*params["bn1"], eps)
    s2, t2 = _fold_bn(*params["bn2"], eps)
    w1 = jnp.transpose(params["w1"], (2, 1, 0)) * s1          # (3, C_in,  C_out)
    w2 = jnp.transpose(params["w2"], (2, 1, 0)) * s2          # (3, C_out, C_out)
    shift1 = params["b1"] * s1 + t1
    shift2 = params["b2"] * s2 + t2

    has_ds = params["wd"] is not None
    if has_ds:
        sd, td = _fold_bn(*params["bnd"], eps)
        wd = jnp.transpose(params["wd"][:, :, 0], (1, 0)) * sd  # (C_in, C_out)
        shifts = jnp.stack([shift1, shift2, td])              # (3, C_out) single operand
    else:
        shifts = jnp.stack([shift1, shift2])                  # (2, C_out)

    def pad_axis(a, axis, to):
        pad = [(0, 0)] * a.ndim
        pad[axis] = (0, to - a.shape[axis])
        return jnp.pad(a, pad)

    w1 = pad_axis(pad_axis(w1, 1, C_in_p), 2, C_out_p).astype(compute_dtype)
    w2 = pad_axis(pad_axis(w2, 1, C_out_p), 2, C_out_p).astype(compute_dtype)
    shifts = pad_axis(shifts, 1, C_out_p).astype(jnp.float32)
    if has_ds:
        wd = pad_axis(pad_axis(wd, 0, C_in_p), 1, C_out_p).astype(compute_dtype)

    # ---- NCL -> NLC, pad channels + length (2 front / L_pad-L+6 back -> L_pad+8 rows) ----
    x_nlc = jnp.transpose(x_ncl, (0, 2, 1)).astype(compute_dtype)           # (N, L, C_in)
    x_pad = jnp.pad(x_nlc, ((0, 0), (2, L_pad - L + 6), (0, C_in_p - C_in)))  # (N, L_pad+8, C_in_p)

    kernel = _make_kernel(LT, L, has_ds, compute_dtype)
    full = lambda shape: pl.BlockSpec(shape, lambda n, l: (0,) * len(shape))
    halo_blocks = LT // 8

    in_specs = [
        # main LT rows of the tile (padded rows [l*LT, (l+1)*LT))
        pl.BlockSpec((1, LT, C_in_p), lambda n, l: (n, l, 0)),
        # 8-row halo (padded rows [(l+1)*LT, (l+1)*LT+8)) — same array, no wrapper gather
        pl.BlockSpec((1, 8, C_in_p), lambda n, l: (n, (l + 1) * halo_blocks, 0)),
        full((3, C_in_p, C_out_p)),                           # w1 (BN1 folded)
        full((3, C_out_p, C_out_p)),                          # w2 (BN2 folded)
    ]
    operands = [x_pad, x_pad, w1, w2]
    if has_ds:
        in_specs.append(full((C_in_p, C_out_p)))              # wd (BNd folded)
        operands.append(wd)
    in_specs.append(full(shifts.shape))                       # stacked shifts
    operands.append(shifts)

    out = pl.pallas_call(
        kernel,
        out_shape=jax.ShapeDtypeStruct((N, L_pad, C_out_p), jnp.float32),
        grid_spec=pltpu.PrefetchScalarGridSpec(
            num_scalar_prefetch=0,
            grid=(N, nLT),
            in_specs=in_specs,
            out_specs=pl.BlockSpec((1, LT, C_out_p), lambda n, l: (n, l, 0)),
            scratch_shapes=[pltpu.VMEM((LT + 8, C_in_p), compute_dtype)],
        ),
        compiler_params=pltpu.CompilerParams(
            dimension_semantics=("parallel", "parallel"),
            vmem_limit_bytes=32 * 1024 * 1024,                # safe on v5e/v6e/v7x for these tiles
        ),
    )(*operands)

    out = out[:, :L, :C_out]                                  # drop length / lane padding
    return jnp.transpose(out, (0, 2, 1))                      # back to (N, C_out, L)


# ----------------------------- pure-JAX reference -----------------------------
def reference_block(x, p, eps=1e-5):
    def conv1d(x, w, b, pad):
        y = lax.conv_general_dilated(
            x, w, window_strides=(1,), padding=[(pad, pad)],
            dimension_numbers=("NCH", "OIH", "NCH"))
        if b is not None:
            y = y + b[None, :, None]
        return y

    def bn(x, g, bb, m, v):
        return (x - m[None, :, None]) / jnp.sqrt(v[None, :, None] + eps) \
               * g[None, :, None] + bb[None, :, None]

    h = jnp.maximum(bn(conv1d(x, p["w1"], p["b1"], 1), *p["bn1"]), 0.0)
    y = bn(conv1d(h, p["w2"], p["b2"], 1), *p["bn2"])
    ident = x
    if p["wd"] is not None:
        ident = bn(conv1d(x, p["wd"], None, 0), *p["bnd"])
    return jnp.maximum(y + ident, 0.0)


def make_params(key, c_in, c_out):
    ks = jax.random.split(key, 16)
    u = lambda k, shape, s=0.3: jax.random.uniform(k, shape, jnp.float32, -s, s)
    bn_params = lambda k0, k1, k2, k3: (
        1.0 + u(k0, (c_out,), 0.2),                                        # gamma
        u(k1, (c_out,), 0.2),                                              # beta
        u(k2, (c_out,), 0.2),                                              # running_mean
        0.5 + jax.random.uniform(k3, (c_out,), jnp.float32, 0.0, 1.0),     # running_var
    )
    p = {
        "w1": u(ks[0], (c_out, c_in, 3)),
        "b1": u(ks[1], (c_out,)),
        "bn1": bn_params(ks[2], ks[3], ks[4], ks[5]),
        "w2": u(ks[6], (c_out, c_out, 3)),
        "b2": u(ks[7], (c_out,)),
        "bn2": bn_params(ks[8], ks[9], ks[10], ks[11]),
    }
    if c_in != c_out:
        p["wd"] = u(ks[12], (c_out, c_in, 1))
        p["bnd"] = bn_params(ks[13], ks[14], ks[15], ks[0])
    else:
        p["wd"] = None
        p["bnd"] = None
    return p


if __name__ == "__main__":
    key = jax.random.PRNGKey(0)
    k_x1, k_p1, k_x2, k_p2 = jax.random.split(key, 4)

    # tolerance is loosened vs fp32 because MXU inputs are bf16 (fp32 accumulation)
    TOL = 6e-2

    # --- downsample path (in_channels != out_channels) ---
    N, C_in, C_out, L = 2, 4, 8, 16
    x = jax.random.normal(k_x1, (N, C_in, L), jnp.float32)   # PyTorch Conv1d layout (N, C, L)
    params = make_params(k_p1, C_in, C_out)
    out = jax.block_until_ready(convolution_block(x, params))
    ref = reference_block(x, params)
    assert out.shape == (N, C_out, L)
    assert jnp.allclose(out, ref, atol=TOL, rtol=TOL), "mismatch vs reference (downsample path)"

    # --- identity path (in_channels == out_channels) ---
    x2 = jax.random.normal(k_x2, (N, 8, L), jnp.float32)
    params2 = make_params(k_p2, 8, 8)
    out2 = jax.block_until_ready(convolution_block(x2, params2))
    ref2 = reference_block(x2, params2)
    assert out2.shape == (N, 8, L)
    assert jnp.allclose(out2, ref2, atol=TOL, rtol=TOL), "mismatch vs reference (identity path)"

    print("KERNEL_OK")
</pallas_src>

<mosaic_0001>
module attributes {stable_mosaic.version = 11 : i64} {
  func.func @kernel(%arg0: i32, %arg1: i32, %arg2: memref<1x16x128xbf16, #tpu.memory_space<vmem>>, %arg3: memref<1x8x128xbf16, #tpu.memory_space<vmem>>, %arg4: memref<3x128x128xbf16, #tpu.memory_space<vmem>>, %arg5: memref<3x128x128xbf16, #tpu.memory_space<vmem>>, %arg6: memref<128x128xbf16, #tpu.memory_space<vmem>>, %arg7: memref<3x128xf32, #tpu.memory_space<vmem>>, %arg8: memref<1x16x128xf32, #tpu.memory_space<vmem>>, %arg9: memref<24x128xbf16, #tpu.memory_space<vmem>>) attributes {dimension_semantics = [#tpu.dimension_semantics<parallel>, #tpu.dimension_semantics<parallel>], iteration_bounds = array<i64: 2, 1>, scalar_prefetch = 0 : i64, scratch_operands = 1 : i64, tpu.core_type = #tpu.core_type<tc>, window_params = [{transform_indices = @transform_0, window_bounds = array<i64: 1, 16, 128>}, {transform_indices = @transform_1, window_bounds = array<i64: 1, 8, 128>}, {pipeline_mode = #tpu.pipeline_mode<synchronous>, transform_indices = @transform_2, window_bounds = array<i64: 3, 128, 128>}, {pipeline_mode = #tpu.pipeline_mode<synchronous>, transform_indices = @transform_3, window_bounds = array<i64: 3, 128, 128>}, {pipeline_mode = #tpu.pipeline_mode<synchronous>, transform_indices = @transform_4, window_bounds = array<i64: 128, 128>}, {pipeline_mode = #tpu.pipeline_mode<synchronous>, transform_indices = @transform_5, window_bounds = array<i64: 3, 128>}, {transform_indices = @transform_6, window_bounds = array<i64: 1, 16, 128>}]} {
    %c0 = arith.constant 0 : index
    %c0_0 = arith.constant 0 : index
    %c0_1 = arith.constant 0 : index
    %0 = vector.load %arg2[%c0, %c0_0, %c0_1] : memref<1x16x128xbf16, #tpu.memory_space<vmem>>, vector<1x16x128xbf16>
    %1 = vector.shape_cast %0 : vector<1x16x128xbf16> to vector<16x128xbf16>
    %c0_2 = arith.constant 0 : index
    %c0_3 = arith.constant 0 : index
    %2 = vector.load %arg9[%c0_2, %c0_3] : memref<24x128xbf16, #tpu.memory_space<vmem>>, vector<16x128xbf16>
    tpu.vector_store %arg9[%c0_2, %c0_3], %1 {strides = array<i32>} : memref<24x128xbf16, #tpu.memory_space<vmem>>, vector<16x128xbf16>,
    %c0_4 = arith.constant 0 : index
    %c0_5 = arith.constant 0 : index
    %c0_6 = arith.constant 0 : index
    %3 = vector.load %arg3[%c0_4, %c0_5, %c0_6] : memref<1x8x128xbf16, #tpu.memory_space<vmem>>, vector<1x8x128xbf16>
    %4 = vector.shape_cast %3 : vector<1x8x128xbf16> to vector<8x128xbf16>
    %c16 = arith.constant 16 : index
    %c0_7 = arith.constant 0 : index
    %5 = vector.load %arg9[%c16, %c0_7] : memref<24x128xbf16, #tpu.memory_space<vmem>>, vector<8x128xbf16>
    tpu.vector_store %arg9[%c16, %c0_7], %4 {strides = array<i32>} : memref<24x128xbf16, #tpu.memory_space<vmem>>, vector<8x128xbf16>,
    %c0_8 = arith.constant 0 : index
    %c0_9 = arith.constant 0 : index
    %6 = vector.load %arg9[%c0_8, %c0_9] : memref<24x128xbf16, #tpu.memory_space<vmem>>, vector<24x128xbf16>
    %7 = vector.extract_strided_slice %6 {offsets = [0, 0], sizes = [18, 128], strides = [1, 1]} : vector<24x128xbf16> to vector<18x128xbf16>
    %c0_10 = arith.constant 0 : index
    %c0_11 = arith.constant 0 : index
    %c0_12 = arith.constant 0 : index
    %8 = vector.load %arg4[%c0_10, %c0_11, %c0_12] : memref<3x128x128xbf16, #tpu.memory_space<vmem>>, vector<1x128x128xbf16>
    %9 = vector.shape_cast %8 : vector<1x128x128xbf16> to vector<128x128xbf16>
    %cst = arith.constant dense<0.000000e+00> : vector<18x128xf32>
    %10 = tpu.matmul %7, %9, %cst {dimension_numbers = #tpu.dot_dimension_numbers<[1], [0], [0], [1], [0, 0, 1, 1], [], []>} : vector<18x128xbf16>, vector<128x128xbf16>, vector<18x128xf32> -> vector<18x128xf32>
    %11 = vector.extract_strided_slice %6 {offsets = [1, 0], sizes = [18, 128], strides = [1, 1]} : vector<24x128xbf16> to vector<18x128xbf16>
    %c1 = arith.constant 1 : index
    %c0_13 = arith.constant 0 : index
    %c0_14 = arith.constant 0 : index
    %12 = vector.load %arg4[%c1, %c0_13, %c0_14] : memref<3x128x128xbf16, #tpu.memory_space<vmem>>, vector<1x128x128xbf16>
    %13 = vector.shape_cast %12 : vector<1x128x128xbf16> to vector<128x128xbf16>
    %cst_15 = arith.constant dense<0.000000e+00> : vector<18x128xf32>
    %14 = tpu.matmul %11, %13, %cst_15 {dimension_numbers = #tpu.dot_dimension_numbers<[1], [0], [0], [1], [0, 0, 1, 1], [], []>} : vector<18x128xbf16>, vector<128x128xbf16>, vector<18x128xf32> -> vector<18x128xf32>
    %15 = arith.addf %10, %14 : vector<18x128xf32>
    %16 = vector.extract_strided_slice %6 {offsets = [2, 0], sizes = [18, 128], strides = [1, 1]} : vector<24x128xbf16> to vector<18x128xbf16>
    %c2 = arith.constant 2 : index
    %c0_16 = arith.constant 0 : index
    %c0_17 = arith.constant 0 : index
    %17 = vector.load %arg4[%c2, %c0_16, %c0_17] : memref<3x128x128xbf16, #tpu.memory_space<vmem>>, vector<1x128x128xbf16>
    %18 = vector.shape_cast %17 : vector<1x128x128xbf16> to vector<128x128xbf16>
    %cst_18 = arith.constant dense<0.000000e+00> : vector<18x128xf32>
    %19 = tpu.matmul %16, %18, %cst_18 {dimension_numbers = #tpu.dot_dimension_numbers<[1], [0], [0], [1], [0, 0, 1, 1], [], []>} : vector<18x128xbf16>, vector<128x128xbf16>, vector<18x128xf32> -> vector<18x128xf32>
    %20 = arith.addf %15, %19 : vector<18x128xf32>
    %c0_19 = arith.constant 0 : index
    %c0_20 = arith.constant 0 : index
    %21 = vector.load %arg7[%c0_19, %c0_20] : memref<3x128xf32, #tpu.memory_space<vmem>>, vector<1x128xf32>
    %22 = vector.broadcast %21 : vector<1x128xf32> to vector<18x128xf32>
    %23 = arith.addf %20, %22 : vector<18x128xf32>
    %cst_21 = arith.constant 0.000000e+00 : f32
    %24 = vector.broadcast %cst_21 : f32 to vector<18x128xf32>
    %25 = arith.maximumf %23, %24 : vector<18x128xf32>
    %26 = tpu.iota {dimensions = array<i32: 0>} : vector<18x1xi32>
    %c16_i32 = arith.constant 16 : i32
    %27 = arith.muli %arg1, %c16_i32 : i32
    %c1_i32 = arith.constant 1 : i32
    %28 = arith.subi %27, %c1_i32 : i32
    %29 = vector.broadcast %28 : i32 to vector<18x1xi32>
    %30 = arith.addi %29, %26 : vector<18x1xi32>
    %c0_i32 = arith.constant 0 : i32
    %31 = vector.broadcast %c0_i32 : i32 to vector<18x1xi32>
    %32 = arith.cmpi sge, %30, %31 : vector<18x1xi32>
    %c16_i32_22 = arith.constant 16 : i32
    %33 = vector.broadcast %c16_i32_22 : i32 to vector<18x1xi32>
    %34 = arith.cmpi slt, %30, %33 : vector<18x1xi32>
    %35 = arith.andi %32, %34 : vector<18x1xi1>
    %cst_23 = arith.constant 0.000000e+00 : f32
    %36 = vector.shape_cast %35 : vector<18x1xi1> to vector<18x1xi1>
    %37 = vector.broadcast %36 : vector<18x1xi1> to vector<18x128xi1>
    %38 = vector.broadcast %cst_23 : f32 to vector<18x128xf32>
    %39 = arith.select %37, %25, %38 : vector<18x128xi1>, vector<18x128xf32>
    %40 = arith.truncf %39 : vector<18x128xf32> to vector<18x128xbf16>
    %41 = vector.extract_strided_slice %40 {offsets = [0, 0], sizes = [16, 128], strides = [1, 1]} : vector<18x128xbf16> to vector<16x128xbf16>
    %c0_24 = arith.constant 0 : index
    %c0_25 = arith.constant 0 : index
    %c0_26 = arith.constant 0 : index
    %42 = vector.load %arg5[%c0_24, %c0_25, %c0_26] : memref<3x128x128xbf16, #tpu.memory_space<vmem>>, vector<1x128x128xbf16>
    %43 = vector.shape_cast %42 : vector<1x128x128xbf16> to vector<128x128xbf16>
    %cst_27 = arith.constant dense<0.000000e+00> : vector<16x128xf32>
    %44 = tpu.matmul %41, %43, %cst_27 {dimension_numbers = #tpu.dot_dimension_numbers<[1], [0], [0], [1], [0, 0, 1, 1], [], []>} : vector<16x128xbf16>, vector<128x128xbf16>, vector<16x128xf32> -> vector<16x128xf32>
    %45 = vector.extract_strided_slice %40 {offsets = [1, 0], sizes = [16, 128], strides = [1, 1]} : vector<18x128xbf16> to vector<16x128xbf16>
    %c1_28 = arith.constant 1 : index
    %c0_29 = arith.constant 0 : index
    %c0_30 = arith.constant 0 : index
    %46 = vector.load %arg5[%c1_28, %c0_29, %c0_30] : memref<3x128x128xbf16, #tpu.memory_space<vmem>>, vector<1x128x128xbf16>
    %47 = vector.shape_cast %46 : vector<1x128x128xbf16> to vector<128x128xbf16>
    %cst_31 = arith.constant dense<0.000000e+00> : vector<16x128xf32>
    %48 = tpu.matmul %45, %47, %cst_31 {dimension_numbers = #tpu.dot_dimension_numbers<[1], [0], [0], [1], [0, 0, 1, 1], [], []>} : vector<16x128xbf16>, vector<128x128xbf16>, vector<16x128xf32> -> vector<16x128xf32>
    %49 = arith.addf %44, %48 : vector<16x128xf32>
    %50 = vector.extract_strided_slice %40 {offsets = [2, 0], sizes = [16, 128], strides = [1, 1]} : vector<18x128xbf16> to vector<16x128xbf16>
    %c2_32 = arith.constant 2 : index
    %c0_33 = arith.constant 0 : index
    %c0_34 = arith.constant 0 : index
    %51 = vector.load %arg5[%c2_32, %c0_33, %c0_34] : memref<3x128x128xbf16, #tpu.memory_space<vmem>>, vector<1x128x128xbf16>
    %52 = vector.shape_cast %51 : vector<1x128x128xbf16> to vector<128x128xbf16>
    %cst_35 = arith.constant dense<0.000000e+00> : vector<16x128xf32>
    %53 = tpu.matmul %50, %52, %cst_35 {dimension_numbers = #tpu.dot_dimension_numbers<[1], [0], [0], [1], [0, 0, 1, 1], [], []>} : vector<16x128xbf16>, vector<128x128xbf16>, vector<16x128xf32> -> vector<16x128xf32>
    %54 = arith.addf %49, %53 : vector<16x128xf32>
    %c1_36 = arith.constant 1 : index
    %c0_37 = arith.constant 0 : index
    %55 = vector.load %arg7[%c1_36, %c0_37] : memref<3x128xf32, #tpu.memory_space<vmem>>, vector<1x128xf32>
    %56 = vector.broadcast %55 : vector<1x128xf32> to vector<16x128xf32>
    %57 = arith.addf %54, %56 : vector<16x128xf32>
    %58 = vector.extract_strided_slice %6 {offsets = [2, 0], sizes = [16, 128], strides = [1, 1]} : vector<24x128xbf16> to vector<16x128xbf16>
    %c0_38 = arith.constant 0 : index
    %c0_39 = arith.constant 0 : index
    %59 = vector.load %arg6[%c0_38, %c0_39] : memref<128x128xbf16, #tpu.memory_space<vmem>>, vector<128x128xbf16>
    %cst_40 = arith.constant dense<0.000000e+00> : vector<16x128xf32>
    %60 = tpu.matmul %58, %59, %cst_40 {dimension_numbers = #tpu.dot_dimension_numbers<[1], [0], [0], [1], [0, 0, 1, 1], [], []>} : vector<16x128xbf16>, vector<128x128xbf16>, vector<16x128xf32> -> vector<16x128xf32>
    %c2_41 = arith.constant 2 : index
    %c0_42 = arith.constant 0 : index
    %61 = vector.load %arg7[%c2_41, %c0_42] : memref<3x128xf32, #tpu.memory_space<vmem>>, vector<1x128xf32>
    %62 = vector.broadcast %61 : vector<1x128xf32> to vector<16x128xf32>
    %63 = arith.addf %60, %62 : vector<16x128xf32>
    %64 = arith.addf %57, %63 : vector<16x128xf32>
    %cst_43 = arith.constant 0.000000e+00 : f32
    %65 = vector.broadcast %cst_43 : f32 to vector<16x128xf32>
    %66 = arith.maximumf %64, %65 : vector<16x128xf32>
    %c0_44 = arith.constant 0 : index
    %c0_45 = arith.constant 0 : index
    %c0_46 = arith.constant 0 : index
    %67 = vector.load %arg8[%c0_44, %c0_45, %c0_46] : memref<1x16x128xf32, #tpu.memory_space<vmem>>, vector<1x16x128xf32>
    %68 = vector.shape_cast %67 : vector<1x16x128xf32> to vector<16x128xf32>
    %69 = vector.shape_cast %66 : vector<16x128xf32> to vector<1x16x128xf32>
    tpu.vector_store %arg8[%c0_44, %c0_45, %c0_46], %69 {strides = array<i32>} : memref<1x16x128xf32, #tpu.memory_space<vmem>>, vector<1x16x128xf32>,
    return
  }
  func.func @transform_0(%arg0: i32, %arg1: i32) -> (i32, i32, i32) {
    %c0_i32 = arith.constant 0 : i32
    %c0_i32_0 = arith.constant 0 : i32
    return %arg0, %arg1, %c0_i32 : i32, i32, i32
  }
  func.func @transform_1(%arg0: i32, %arg1: i32) -> (i32, i32, i32) {
    %c1_i32 = arith.constant 1 : i32
    %0 = arith.addi %arg1, %c1_i32 : i32
    %c2_i32 = arith.constant 2 : i32
    %1 = arith.muli %0, %c2_i32 : i32
    %c0_i32 = arith.constant 0 : i32
    %c0_i32_0 = arith.constant 0 : i32
    return %arg0, %1, %c0_i32 : i32, i32, i32
  }
  func.func @transform_2(%arg0: i32, %arg1: i32) -> (i32, i32, i32) {
    %c0_i32 = arith.constant 0 : i32
    %c0_i32_0 = arith.constant 0 : i32
    %c0_i32_1 = arith.constant 0 : i32
    %c0_i32_2 = arith.constant 0 : i32
    return %c0_i32, %c0_i32_0, %c0_i32_1 : i32, i32, i32
  }
  func.func @transform_3(%arg0: i32, %arg1: i32) -> (i32, i32, i32) {
    %c0_i32 = arith.constant 0 : i32
    %c0_i32_0 = arith.constant 0 : i32
    %c0_i32_1 = arith.constant 0 : i32
    %c0_i32_2 = arith.constant 0 : i32
    return %c0_i32, %c0_i32_0, %c0_i32_1 : i32, i32, i32
  }
  func.func @transform_4(%arg0: i32, %arg1: i32) -> (i32, i32) {
    %c0_i32 = arith.constant 0 : i32
    %c0_i32_0 = arith.constant 0 : i32
    %c0_i32_1 = arith.constant 0 : i32
    return %c0_i32, %c0_i32_0 : i32, i32
  }
  func.func @transform_5(%arg0: i32, %arg1: i32) -> (i32, i32) {
    %c0_i32 = arith.constant 0 : i32
    %c0_i32_0 = arith.constant 0 : i32
    %c0_i32_1 = arith.constant 0 : i32
    return %c0_i32, %c0_i32_0 : i32, i32
  }
  func.func @transform_6(%arg0: i32, %arg1: i32) -> (i32, i32, i32) {
    %c0_i32 = arith.constant 0 : i32
    %c0_i32_0 = arith.constant 0 : i32
    return %arg0, %arg1, %c0_i32 : i32, i32, i32
  }
}

</mosaic_0001>

<llo_original>
// kernel: tpu_custom_call.1
$region0: #{tpu_custom_call.1}
  #allocation0 [shape = 'u32[]', space=smem, size = 0x4, offset = 0x4, fixed_abs, tag = 'smem constant byte address 0x4 - core index']
  #allocation1 [shape = 'u32[144,128]{1,0:T(1,128)}', space=vmem, size = 0x12000, scoped, tag = 'internal scratch']
  #allocation2 [shape = 'bf16[24,128]{1,0:T(8,128)(2,1)}', space=vmem, size = 0x1800, scoped, tag = 'scratch operand']
  %s0 = inlined_call_operand.hbm [shape: bf16[2,24,128], index: 0, kind: input, shape index: {}]
  %s1 = inlined_call_operand.hbm [shape: bf16[2,24,128], index: 1, kind: input, shape index: {}]
  %s2 = inlined_call_operand.hbm [shape: bf16[3,128,128], index: 2, kind: input, shape index: {}]
  %s3 = inlined_call_operand.hbm [shape: bf16[3,128,128], index: 3, kind: input, shape index: {}]
  %s4 = inlined_call_operand.hbm [shape: bf16[128,128], index: 4, kind: input, shape index: {}]
  %s5 = inlined_call_operand.vmem [shape: f32[3,128], index: 5, kind: input, shape index: {}]
  %s6 = inlined_call_operand.hbm [shape: f32[2,16,128], index: 6, kind: output, shape index: {}]
  %s7 = sld [smem:[#allocation0]]
  $region77: #{tpu_custom_call.1} parent=0
    _
  %s9 = ssub.s32 1, %s7
  %s10 = scalar_select 0, %s9, %s7
  $region1: #{tpu_custom_call.1} parent=0
    #allocation3 [shape = 'u8[8192]{0}', space=vmem, size = 0x2000, scoped, tag = 'input window, operand 0']
    #allocation4 [shape = 's32[2]{0}', space=sflag, size = 0x8, scoped, tag = 'scoped memory for tpu_custom_call.1']
    #allocation5 [shape = 's32[2]{0}', space=sflag, size = 0x8, scoped, tag = 'scoped memory for tpu_custom_call.1']
    #allocation6 [shape = 'u8[4096]{0}', space=vmem, size = 0x1000, scoped, tag = 'input window, operand 1']
    #allocation7 [shape = 's32[2]{0}', space=sflag, size = 0x8, scoped, tag = 'scoped memory for tpu_custom_call.1']
    #allocation8 [shape = 'u8[98304]{0}', space=vmem, size = 0x18000, scoped, tag = 'input window, operand 2, single buffered']
    #allocation9 [shape = 'u8[98304]{0}', space=vmem, size = 0x18000, scoped, tag = 'input window, operand 3, single buffered']
    #allocation10 [shape = 's32[1]{0}', space=sflag, size = 0x4, scoped, tag = 'scoped memory for tpu_custom_call.1']
    #allocation11 [shape = 'u8[32768]{0}', space=vmem, size = 0x8000, scoped, tag = 'input window, operand 4, single buffered']
    #allocation12 [shape = 'u8[16384]{0}', space=vmem, size = 0x4000, scoped, tag = 'output window, operand 0']
    %11 = vsyncpa [#allocation4], 0
    %s12 = scalar_lea.sflag [#allocation4], 1
    %13 = vsyncpa %s12, 0
    %14 = vsyncpa [#allocation7], 0
    %s15 = scalar_lea.sflag [#allocation7], 1
    %16 = vsyncpa %s15, 0
    %17 = vsyncpa [#allocation10], 0
    %18 = vsyncpa [#allocation5], 0
    %s19 = scalar_lea.sflag [#allocation5], 1
    %20 = vsyncpa %s19, 0
    loop: start=0, step=1, limit=4
    $region2: #{tpu_custom_call.1} parent=1 // loop_pre_header
      _
    $region3: #{tpu_custom_call.1} parent=1 // loop_header
      %s22 = sphi 0, %s26
      %p23 = scmp.ge.s32.totalorder %s22, 4
      %s29 = sphi 0, %s41
      %s30 = sphi 0, %s37
      %s31 = sphi 0, %s29
      %s32 = sphi 0, %s30
      %s33 = sphi 0, %s31
      %s34 = sphi 0, %s32
      %s46 = sphi 0, %s48
      %s49 = sphi 0, %s46
      %s50 = sphi 0, %s49
      %s66 = sphi 0, %s50
      %s78 = sphi 0, %s80
      %s81 = sphi 0, %s78
      %s82 = sphi 0, %s81
      %s98 = sphi 0, %s82
      %s102 = sphi 0, %s102
      %s104 = sphi 0, %s102
      %s105 = sphi 0, %s104
      %s119 = sphi 0, %s105
      %s123 = sphi 0, %s123
      %s125 = sphi 0, %s123
      %s126 = sphi 0, %s125
      %s140 = sphi 0, %s126
      %s144 = sphi 0, %s144
      %s146 = sphi 0, %s144
      %s147 = sphi 0, %s146
      %s161 = sphi 0, %s147
      %s165 = sphi 0, %s165
      %s167 = sphi 0, %s165
      %s168 = sphi 0, %s167
      %s182 = sphi 0, %s168
      %s190 = sphi 0, %s192
      %s193 = sphi 0, %s190
      %s194 = sphi 0, %s193
      %s210 = sphi 0, %s194
    $region4: #{tpu_custom_call.1} parent=1 // loop_header_branch
      %25 = sbr.rel (%p23) target = $region8
    $region5: #{tpu_custom_call.1} parent=1 // loop_body
      %s27 = ssub.s32 %s22, 1
      %s28 = ssub.s32 %s22, 2
      %s35 = sadd.s32 1, %s30
      %p36 = scmp.ge.s32.totalorder %s35, 1
      %s37 = scalar_select %p36, 0, %s35
      %s38 = sadd.s32 1, %s29
      %s39 = scalar_select %p36, %s38, %s29
      %p40 = scmp.ge.s32.totalorder %s39, 2
      %s41 = scalar_select %p40, 0, %s39
      %s42 = ssub.s32 %s29, %s41
      %s43 = ssub.s32 %s30, %s37
      %s44 = sor.u32 %s42, %s43
      %p45 = scmp.eq.s32.totalorder %s44, 0
      %s47 = sadd.s32 %s46, 1
      %s48 = scalar_select %p45, %s46, %s47
      %p51 = pneg %p45
      %p52 = scmp.eq.s32.totalorder %s22, 1
      %p53 = por %p51, %p52
      %p54 = scmp.ne.s32.totalorder %s46, %s49
      %p55 = scmp.eq.s32.totalorder %s22, 0
      %p56 = por %p54, %p55
      %p57 = scmp.ne.s32.totalorder %s46, %s49
      %p58 = scmp.eq.s32.totalorder %s27, 1
      %p59 = por %p57, %p58
      %p60 = scmp.ne.s32.totalorder %s49, %s50
      %p61 = scmp.eq.s32.totalorder %s27, 0
      %p62 = por %p60, %p61
      %p63 = scmp.ne.s32.totalorder %s49, %s50
      %p64 = scmp.eq.s32.totalorder %s28, 1
      %p65 = por %p63, %p64
      %p67 = scmp.ne.s32.totalorder %s50, %s66
      %p68 = scmp.eq.s32.totalorder %s28, 0
      %p69 = por %p67, %p68
      %s70 = sadd.s32 %s30, 1
      %s71 = smul.u32 %s70, 2
      %s72 = sadd.s32 %s37, 1
      %s73 = smul.u32 %s72, 2
      %s74 = ssub.s32 %s29, %s41
      %s75 = ssub.s32 %s71, %s73
      %s76 = sor.u32 %s74, %s75
      %p77 = scmp.eq.s32.totalorder %s76, 0
      %s79 = sadd.s32 %s78, 1
      %s80 = scalar_select %p77, %s78, %s79
      %p83 = pneg %p77
      %p84 = scmp.eq.s32.totalorder %s22, 1
      %p85 = por %p83, %p84
      %p86 = scmp.ne.s32.totalorder %s78, %s81
      %p87 = scmp.eq.s32.totalorder %s22, 0
      %p88 = por %p86, %p87
      %p89 = scmp.ne.s32.totalorder %s78, %s81
      %p90 = scmp.eq.s32.totalorder %s27, 1
      %p91 = por %p89, %p90
      %p92 = scmp.ne.s32.totalorder %s81, %s82
      %p93 = scmp.eq.s32.totalorder %s27, 0
      %p94 = por %p92, %p93
      %p95 = scmp.ne.s32.totalorder %s81, %s82
      %p96 = scmp.eq.s32.totalorder %s28, 1
      %p97 = por %p95, %p96
      %p99 = scmp.ne.s32.totalorder %s82, %s98
      %p100 = scmp.eq.s32.totalorder %s28, 0
      %p101 = por %p99, %p100
      %s103 = sadd.s32 %s102, 1
      %p106 = scmp.eq.s32.totalorder %s22, 1
      %p107 = scmp.ne.s32.totalorder %s102, %s104
      %p108 = scmp.eq.s32.totalorder %s22, 0
      %p109 = por %p107, %p108
      %p110 = scmp.ne.s32.totalorder %s102, %s104
      %p111 = scmp.eq.s32.totalorder %s27, 1
      %p112 = por %p110, %p111
      %p113 = scmp.ne.s32.totalorder %s104, %s105
      %p114 = scmp.eq.s32.totalorder %s27, 0
      %p115 = por %p113, %p114
      %p116 = scmp.ne.s32.totalorder %s104, %s105
      %p117 = scmp.eq.s32.totalorder %s28, 1
      %p118 = por %p116, %p117
      %p120 = scmp.ne.s32.totalorder %s105, %s119
      %p121 = scmp.eq.s32.totalorder %s28, 0
      %p122 = por %p120, %p121
      %s124 = sadd.s32 %s123, 1
      %p127 = scmp.eq.s32.totalorder %s22, 1
      %p128 = scmp.ne.s32.totalorder %s123, %s125
      %p129 = scmp.eq.s32.totalorder %s22, 0
      %p130 = por %p128, %p129
      %p131 = scmp.ne.s32.totalorder %s123, %s125
      %p132 = scmp.eq.s32.totalorder %s27, 1
      %p133 = por %p131, %p132
      %p134 = scmp.ne.s32.totalorder %s125, %s126
      %p135 = scmp.eq.s32.totalorder %s27, 0
      %p136 = por %p134, %p135
      %p137 = scmp.ne.s32.totalorder %s125, %s126
      %p138 = scmp.eq.s32.totalorder %s28, 1
      %p139 = por %p137, %p138
      %p141 = scmp.ne.s32.totalorder %s126, %s140
      %p142 = scmp.eq.s32.totalorder %s28, 0
      %p143 = por %p141, %p142
      %s145 = sadd.s32 %s144, 1
      %p148 = scmp.eq.s32.totalorder %s22, 1
      %p149 = scmp.ne.s32.totalorder %s144, %s146
      %p150 = scmp.eq.s32.totalorder %s22, 0
      %p151 = por %p149, %p150
      %p152 = scmp.ne.s32.totalorder %s144, %s146
      %p153 = scmp.eq.s32.totalorder %s27, 1
      %p154 = por %p152, %p153
      %p155 = scmp.ne.s32.totalorder %s146, %s147
      %p156 = scmp.eq.s32.totalorder %s27, 0
      %p157 = por %p155, %p156
      %p158 = scmp.ne.s32.totalorder %s146, %s147
      %p159 = scmp.eq.s32.totalorder %s28, 1
      %p160 = por %p158, %p159
      %p162 = scmp.ne.s32.totalorder %s147, %s161
      %p163 = scmp.eq.s32.totalorder %s28, 0
      %p164 = por %p162, %p163
      %s166 = sadd.s32 %s165, 1
      %p169 = scmp.eq.s32.totalorder %s22, 1
      %p170 = scmp.ne.s32.totalorder %s165, %s167
      %p171 = scmp.eq.s32.totalorder %s22, 0
      %p172 = por %p170, %p171
      %p173 = scmp.ne.s32.totalorder %s165, %s167
      %p174 = scmp.eq.s32.totalorder %s27, 1
      %p175 = por %p173, %p174
      %p176 = scmp.ne.s32.totalorder %s167, %s168
      %p177 = scmp.eq.s32.totalorder %s27, 0
      %p178 = por %p176, %p177
      %p179 = scmp.ne.s32.totalorder %s167, %s168
      %p180 = scmp.eq.s32.totalorder %s28, 1
      %p181 = por %p179, %p180
      %p183 = scmp.ne.s32.totalorder %s168, %s182
      %p184 = scmp.eq.s32.totalorder %s28, 0
      %p185 = por %p183, %p184
      %s186 = ssub.s32 %s29, %s41
      %s187 = ssub.s32 %s30, %s37
      %s188 = sor.u32 %s186, %s187
      %p189 = scmp.eq.s32.totalorder %s188, 0
      %s191 = sadd.s32 %s190, 1
      %s192 = scalar_select %p189, %s190, %s191
      %p195 = pneg %p189
      %p196 = scmp.eq.s32.totalorder %s22, 1
      %p197 = por %p195, %p196
      %p198 = scmp.ne.s32.totalorder %s190, %s193
      %p199 = scmp.eq.s32.totalorder %s22, 0
      %p200 = por %p198, %p199
      %p201 = scmp.ne.s32.totalorder %s190, %s193
      %p202 = scmp.eq.s32.totalorder %s27, 1
      %p203 = por %p201, %p202
      %p204 = scmp.ne.s32.totalorder %s193, %s194
      %p205 = scmp.eq.s32.totalorder %s27, 0
      %p206 = por %p204, %p205
      %p207 = scmp.ne.s32.totalorder %s193, %s194
      %p208 = scmp.eq.s32.totalorder %s28, 1
      %p209 = por %p207, %p208
      %p211 = scmp.ne.s32.totalorder %s194, %s210
      %p212 = scmp.eq.s32.totalorder %s28, 0
      %p213 = por %p211, %p212
      %p214 = scmp.le.s32.totalorder 1, %s22
      %p215 = scmp.lt.s32.totalorder %s22, 3
      %p216 = pnand %p214, %p215
      %p217 = pneg %p216
      // Predicated region
      $region9: #{tpu_custom_call.1} parent=5 // pred_check
        _
      $region10: #{tpu_custom_call.1} parent=5 // pred_check_branch
        %219 = sbr.rel (%p216) target = $region12
      $region11: #{tpu_custom_call.1} parent=5 // pred_region
        %s220 = ssub.s32 %s22, 1
        // Predicated region
        $region13: #{tpu_custom_call.1} parent=11 // pred_check
          %p221 = pneg %p115
        $region14: #{tpu_custom_call.1} parent=11 // pred_check_branch
          %223 = sbr.rel (%p221) target = $region16
        $region15: #{tpu_custom_call.1} parent=11 // pred_region
          %s225 = ssub.s32 3072, 3072
          %226 = vsyncadd [#allocation7], %s225
          %s227 = sshll.u32 [#allocation8], 4
          %s228 = int_to_ptr.vmem [resolvable:$true] %s227
          %233 = dma.hbm_to_vmem [thread:$0]  %s2, 3072, %s228, [#allocation7], 64, 64, 4
        $region16: #{tpu_custom_call.1} parent=11 // pred_fallthru
          _
        // Predicated region
        $region17: #{tpu_custom_call.1} parent=11 // pred_check
          %p234 = pneg %p136
        $region18: #{tpu_custom_call.1} parent=11 // pred_check_branch
          %236 = sbr.rel (%p234) target = $region20
        $region19: #{tpu_custom_call.1} parent=11 // pred_region
          %s238 = ssub.s32 3072, 3072
          %239 = vsyncadd [#allocation10], %s238
          %s240 = sshll.u32 [#allocation9], 4
          %s241 = int_to_ptr.vmem [resolvable:$true] %s240
          %246 = dma.hbm_to_vmem [thread:$0]  %s3, 3072, %s241, [#allocation10], 64, 64, 4
        $region20: #{tpu_custom_call.1} parent=11 // pred_fallthru
          _
        // Predicated region
        $region21: #{tpu_custom_call.1} parent=11 // pred_check
          %p247 = pneg %p157
        $region22: #{tpu_custom_call.1} parent=11 // pred_check_branch
          %249 = sbr.rel (%p247) target = $region24
        $region23: #{tpu_custom_call.1} parent=11 // pred_region
          %s251 = ssub.s32 1024, 1024
          %252 = vsyncadd [#allocation10], %s251
          %s253 = sshll.u32 [#allocation11], 4
          %s254 = int_to_ptr.vmem [resolvable:$true] %s253
          %259 = dma.hbm_to_vmem [thread:$0]  %s4, 1024, %s254, [#allocation10], 64, 64, 4
        $region24: #{tpu_custom_call.1} parent=11 // pred_fallthru
          _
        // Predicated region
        $region25: #{tpu_custom_call.1} parent=11 // pred_check
          %p260 = pneg %p178
        $region26: #{tpu_custom_call.1} parent=11 // pred_check_branch
          %262 = sbr.rel (%p260) target = $region28
        $region27: #{tpu_custom_call.1} parent=11 // pred_region
          _
        $region28: #{tpu_custom_call.1} parent=11 // pred_fallthru
          _
      $region12: #{tpu_custom_call.1} parent=5 // pred_fallthru
        _
      %p263 = scmp.lt.s32.totalorder %s22, 2
      // Predicated region
      $region29: #{tpu_custom_call.1} parent=5 // pred_check
        %p264 = pneg %p263
      $region30: #{tpu_custom_call.1} parent=5 // pred_check_branch
        %266 = sbr.rel (%p264) target = $region32
      $region31: #{tpu_custom_call.1} parent=5 // pred_region
        // Predicated region
        $region33: #{tpu_custom_call.1} parent=31 // pred_check
          %p267 = pneg %p56
        $region34: #{tpu_custom_call.1} parent=31 // pred_check_branch
          %269 = sbr.rel (%p267) target = $region36
        $region35: #{tpu_custom_call.1} parent=31 // pred_region
          %s270 = sand.u32 %s46, 1
          %s271 = scalar_lea.sflag [#allocation4], %s270
          %s272 = sand.u32 %s46, 1
          %s273 = smul.addr %s272, 8
          %s274 = scalar_lea.vmem [#allocation3], %s273
          %s275 = smul.u32 2, %s30
          %s276 = ssub.s32 3, %s275
          %p277 = scmp.lt.s32.totalorder %s276, 2
          %s278 = scalar_select %p277, %s276, 2
          %s279 = smul.u32 64, %s278
          %s281 = ssub.s32 128, %s279
          %282 = vsyncadd %s271, %s281
          %p283 = scmp.ne.s32.totalorder 0, %s279
          %s284 = smul.addr %s29, 3
          %s285 = sadd.s32 %s275, %s284
          %s286 = smul.addr %s285, 64
          %s287 = scalar_lea.hbm %s0, %s286
          %s288 = smul.u32 4, %s278
          %s289 = sshll.u32 %s274, 4
          %s290 = int_to_ptr.vmem [resolvable:$true] %s289
          %s291 = sshll.u32 %s288, 4
          %295 = dma.hbm_to_vmem [thread:$0]  (%p283), %s287, %s291, %s290, %s271, 64, 64, 4
        $region36: #{tpu_custom_call.1} parent=31 // pred_fallthru
          _
        // Predicated region
        $region37: #{tpu_custom_call.1} parent=31 // pred_check
          %p296 = pneg %p88
        $region38: #{tpu_custom_call.1} parent=31 // pred_check_branch
          %298 = sbr.rel (%p296) target = $region40
        $region39: #{tpu_custom_call.1} parent=31 // pred_region
          %s299 = sand.u32 %s22, 1
          %s300 = scalar_lea.sflag [#allocation7], %s299
          %s301 = sand.u32 %s78, 1
          %s302 = smul.addr %s301, 4
          %s303 = scalar_lea.vmem [#allocation6], %s302
          %s304 = sadd.s32 %s30, 1
          %s305 = smul.u32 %s304, 2
          %s307 = ssub.s32 64, 64
          %308 = vsyncadd %s300, %s307
          %s309 = smul.addr %s29, 3
          %s310 = sadd.s32 %s305, %s309
          %s311 = smul.addr %s310, 64
          %s312 = scalar_lea.hbm %s1, %s311
          %s314 = sshll.u32 %s303, 4
          %s315 = int_to_ptr.vmem [resolvable:$true] %s314
          %317 = dma.hbm_to_vmem [thread:$0]  %s312, 64, %s315, %s300
        $region40: #{tpu_custom_call.1} parent=31 // pred_fallthru
          _
      $region32: #{tpu_custom_call.1} parent=5 // pred_fallthru
        _
      %p318 = scmp.le.s32.totalorder 1, %s22
      %p319 = scmp.lt.s32.totalorder %s22, 3
      %p320 = pnand %p318, %p319
      %p321 = pneg %p320
      // Predicated region
      $region41: #{tpu_custom_call.1} parent=5 // pred_check
        _
      $region42: #{tpu_custom_call.1} parent=5 // pred_check_branch
        %323 = sbr.rel (%p320) target = $region44
      $region43: #{tpu_custom_call.1} parent=5 // pred_region
        %s324 = ssub.s32 %s22, 1
        %s325 = sand.u32 %s49, 1
        %s326 = scalar_lea.sflag [#allocation4], %s325
        %s327 = sand.u32 %s49, 1
        %s328 = smul.addr %s327, 8
        %s329 = scalar_lea.vmem [#allocation3], %s328
        // Predicated region
        $region45: #{tpu_custom_call.1} parent=43 // pred_check
          %p330 = pneg %p62
        $region46: #{tpu_custom_call.1} parent=43 // pred_check_branch
          %332 = sbr.rel (%p330) target = $region48
        $region47: #{tpu_custom_call.1} parent=43 // pred_region
          %333 = dma.done %s326, 128
        $region48: #{tpu_custom_call.1} parent=43 // pred_fallthru
          _
        %s334 = sand.u32 %s27, 1
        %s335 = scalar_lea.sflag [#allocation7], %s334
        %s336 = sand.u32 %s81, 1
        %s337 = smul.addr %s336, 4
        %s338 = scalar_lea.vmem [#allocation6], %s337
        // Predicated region
        $region49: #{tpu_custom_call.1} parent=43 // pred_check
          %p339 = pneg %p94
        $region50: #{tpu_custom_call.1} parent=43 // pred_check_branch
          %341 = sbr.rel (%p339) target = $region52
        $region51: #{tpu_custom_call.1} parent=43 // pred_region
          %342 = dma.done %s335, 64
        $region52: #{tpu_custom_call.1} parent=43 // pred_fallthru
          _
        // Predicated region
        $region53: #{tpu_custom_call.1} parent=43 // pred_check
          %p343 = pneg %p115
        $region54: #{tpu_custom_call.1} parent=43 // pred_check_branch
          %345 = sbr.rel (%p343) target = $region56
        $region55: #{tpu_custom_call.1} parent=43 // pred_region
          %346 = dma.done [#allocation7], 3072
        $region56: #{tpu_custom_call.1} parent=43 // pred_fallthru
          _
        // Predicated region
        $region57: #{tpu_custom_call.1} parent=43 // pred_check
          %p347 = pneg %p136
        $region58: #{tpu_custom_call.1} parent=43 // pred_check_branch
          %349 = sbr.rel (%p347) target = $region60
        $region59: #{tpu_custom_call.1} parent=43 // pred_region
          %350 = dma.done [#allocation10], 3072
        $region60: #{tpu_custom_call.1} parent=43 // pred_fallthru
          _
        // Predicated region
        $region61: #{tpu_custom_call.1} parent=43 // pred_check
          %p351 = pneg %p157
        $region62: #{tpu_custom_call.1} parent=43 // pred_check_branch
          %353 = sbr.rel (%p351) target = $region64
        $region63: #{tpu_custom_call.1} parent=43 // pred_region
          %354 = dma.done [#allocation10], 1024
        $region64: #{tpu_custom_call.1} parent=43 // pred_fallthru
          _
        %s355 = sand.u32 %s49, 1
        %s356 = scalar_lea.sflag [#allocation4], %s355
        %s357 = sand.u32 %s49, 1
        %s358 = smul.addr %s357, 8
        %s359 = scalar_lea.vmem [#allocation3], %s358
        %p360 = pneg %p62
        %p361 = pneg %p59
        %s362 = sand.u32 %s27, 1
        %s363 = scalar_lea.sflag [#allocation7], %s362
        %s364 = sand.u32 %s81, 1
        %s365 = smul.addr %s364, 4
        %s366 = scalar_lea.vmem [#allocation6], %s365
        %p367 = pneg %p94
        %p368 = pneg %p91
        %p369 = pneg %p115
        %p370 = pneg %p112
        %p371 = pneg %p136
        %p372 = pneg %p133
        %p373 = pneg %p157
        %p374 = pneg %p154
        %p375 = pneg %p178
        %p376 = pneg %p175
        %p377 = pneg %p206
        %p378 = pneg %p203
        %s379 = sand.u32 %s193, 1
        %s380 = scalar_lea.sflag [#allocation5], %s379
        %s381 = sand.u32 %s193, 1
        %s382 = smul.addr %s381, 16
        %s383 = scalar_lea.vmem [#allocation12], %s382
        %s384 = smul.u32 2, %s32
        %s385 = ssub.s32 3, %s384
        %p386 = scmp.lt.s32.totalorder %s385, 2
        %s387 = scalar_select %p386, %s385, 2
        %s388 = smul.u32 64, %s387
        %s389 = sadd.s32 %s32, 1
        %s390 = smul.u32 %s389, 2
        %s391 = smul.u32 2, %s32
        %v393 = vld [vmem:[%s329] sm:$0xf]
        %v394 = vld [vmem:[%s329 + $0x4] sm:$0xf]
        %395 = vst [vmem:[#allocation2] sm:$0xf] %v393
        %396 = vst [vmem:[#allocation2 + $0x4] sm:$0xf] %v394
        %v397 = vld [vmem:[%s338] sm:$0xf]
        %398 = vst [vmem:[#allocation2 + $0x8] sm:$0xf] %v397
        %v399 = vld [vmem:[#allocation2] sm:$0xf]
        %v400 = vld [vmem:[#allocation2 + $0x4] sm:$0xf]
        %v401 = vld [vmem:[#allocation2 + $0x8] sm:$0xf]
        %v402 = vld [vmem:[#allocation8] sm:$0xf]
        %v403 = vld [vmem:[#allocation8 + $0x4] sm:$0xf]
        %v404 = vld [vmem:[#allocation8 + $0x8] sm:$0xf]
        %v405 = vld [vmem:[#allocation8 + $0xc] sm:$0xf]
        %v406 = vld [vmem:[#allocation8 + $0x10] sm:$0xf]
        %v407 = vld [vmem:[#allocation8 + $0x14] sm:$0xf]
        %v408 = vld [vmem:[#allocation8 + $0x18] sm:$0xf]
        %v409 = vld [vmem:[#allocation8 + $0x1c] sm:$0xf]
        %v410 = vld [vmem:[#allocation8 + $0x20] sm:$0xf]
        %v411 = vld [vmem:[#allocation8 + $0x24] sm:$0xf]
        %v412 = vld [vmem:[#allocation8 + $0x28] sm:$0xf]
        %v413 = vld [vmem:[#allocation8 + $0x2c] sm:$0xf]
        %v414 = vld [vmem:[#allocation8 + $0x30] sm:$0xf]
        %v415 = vld [vmem:[#allocation8 + $0x34] sm:$0xf]
        %v416 = vld [vmem:[#allocation8 + $0x38] sm:$0xf]
        %v417 = vld [vmem:[#allocation8 + $0x3c] sm:$0xf]
        %s418 = scalar_lea.vmem [#allocation8], 64
        %v419 = vld [vmem:[%s418] sm:$0xf]
        %v420 = vld [vmem:[%s418 + $0x4] sm:$0xf]
        %v421 = vld [vmem:[%s418 + $0x8] sm:$0xf]
        %v422 = vld [vmem:[%s418 + $0xc] sm:$0xf]
        %v423 = vld [vmem:[%s418 + $0x10] sm:$0xf]
        %v424 = vld [vmem:[%s418 + $0x14] sm:$0xf]
        %v425 = vld [vmem:[%s418 + $0x18] sm:$0xf]
        %v426 = vld [vmem:[%s418 + $0x1c] sm:$0xf]
        %v427 = vld [vmem:[%s418 + $0x20] sm:$0xf]
        %v428 = vld [vmem:[%s418 + $0x24] sm:$0xf]
        %v429 = vld [vmem:[%s418 + $0x28] sm:$0xf]
        %v430 = vld [vmem:[%s418 + $0x2c] sm:$0xf]
        %v431 = vld [vmem:[%s418 + $0x30] sm:$0xf]
        %v432 = vld [vmem:[%s418 + $0x34] sm:$0xf]
        %v433 = vld [vmem:[%s418 + $0x38] sm:$0xf]
        %v434 = vld [vmem:[%s418 + $0x3c] sm:$0xf]
        %v438 = vunpack.c.l.b16 %v399
        %v439 = vunpack.c.l.b16 %v400
        %v440 = vunpack.c.l.b16 %v401
        %v441 = vpack.c.b16 %v439, %v438
        %v442 = vpack.c.b16 %v440, %v440
        %vm443 = vsmask.f32 7424
        %v445 = vshrl.u32 %v441, 16
        %v447 = vshll.u32 %v441, 16
        %v449 = vrot.slane %v447, 1
        %v450 = vor.u32 %v445, %v449
        %v452 = vshll.u32 %v442, 16
        %v454 = vrot.slane %v452, 1
        %v455 = vsel %vm443, %v450, %v454
        %v456 = vshrl.u32 %v442, 16
        %v458 = vor.u32 %v456, %v454
        %v477 = vunpack.c.l.b16 %v419
        %v478 = vunpack.c.l.b16 %v420
        %v479 = vunpack.c.l.b16 %v421
        %v480 = vunpack.c.l.b16 %v422
        %v481 = vunpack.c.l.b16 %v423
        %v482 = vunpack.c.l.b16 %v424
        %v483 = vunpack.c.l.b16 %v425
        %v484 = vunpack.c.l.b16 %v426
        %v485 = vunpack.c.l.b16 %v427
        %v486 = vunpack.c.l.b16 %v428
        %v487 = vunpack.c.l.b16 %v429
        %v488 = vunpack.c.l.b16 %v430
        %v489 = vunpack.c.l.b16 %v431
        %v490 = vunpack.c.l.b16 %v432
        %v491 = vunpack.c.l.b16 %v433
        %v492 = vunpack.c.l.b16 %v434
        %v493 = vpack.c.b16 %v478, %v477
        %v494 = vpack.c.b16 %v480, %v479
        %v495 = vpack.c.b16 %v482, %v481
        %v496 = vpack.c.b16 %v484, %v483
        %v497 = vpack.c.b16 %v486, %v485
        %v498 = vpack.c.b16 %v488, %v487
        %v499 = vpack.c.b16 %v490, %v489
        %v500 = vpack.c.b16 %v492, %v491
        %509 = vmatprep.subr.bf16.mxu0 0
        %510 = vmatpush1.bf16.msra.mxu0 %v493
        %511 = vmatprep.subr.bf16.mxu0 0
        %512 = vmatpush1.bf16.msra.mxu0 %v494
        %513 = vmatprep.subr.bf16.mxu0 0
        %514 = vmatpush1.bf16.msra.mxu0 %v495
        %515 = vmatprep.subr.bf16.mxu0 0
        %516 = vmatpush1.bf16.msra.mxu0 %v496
        %517 = vmatprep.subr.bf16.mxu0 0
        %518 = vmatpush1.bf16.msra.mxu0 %v497
        %519 = vmatprep.subr.bf16.mxu0 0
        %520 = vmatpush1.bf16.msra.mxu0 %v498
        %521 = vmatprep.subr.bf16.mxu0 0
        %522 = vmatpush1.bf16.msra.mxu0 %v499
        %523 = vmatprep.subr.bf16.mxu0 0
        %524 = vmatpush1.bf16.msra.mxu0 %v500
        %525 = vmatprep.subr.bf16.mxu0 0
        %526 = vmatpush1.bf16.msra.mxu0 0
        %527 = vmatprep.subr.bf16.mxu0 0
        %528 = vmatpush1.bf16.msra.mxu0 0
        %529 = vmatprep.subr.bf16.mxu0 0
        %530 = vmatpush1.bf16.msra.mxu0 0
        %531 = vmatprep.subr.bf16.mxu0 0
        %532 = vmatpush1.bf16.msra.mxu0 0
        %533 = vmatprep.subr.bf16.mxu0 0
        %534 = vmatpush1.bf16.msra.mxu0 0
        %535 = vmatprep.subr.bf16.mxu0 0
        %536 = vmatpush1.bf16.msra.mxu0 0
        %537 = vmatprep.subr.bf16.mxu0 0
        %538 = vmatpush1.bf16.msra.mxu0 0
        %539 = vmatprep.subr.bf16.mxu0 0
        %540 = vmatpush1.bf16.msra.mxu0 0
        %541 = vmatprep.mubr.bf16.mxu0 0
        %542 = vmatmul.mubr.bf16.gmra.mrb[0].mxu0 %v455
        %v543 = vpop.f32.mrb[0].mxu0
        %v544 = vadd.f32 0.0, %v543
        %v545 = vpop.f32.mrb[0].mxu0
        %v546 = vpop.f32.mrb[0].mxu0
        %v547 = vadd.f32 0.0, %v546
        %v548 = vpop.f32.mrb[0].mxu0
        %549 = vmatprep.mubr.bf16.mxu0 0
        %550 = vmatmul.mubr.bf16.gmra.mrb[0].mxu0 %v458
        %v551 = vpop.f32.mrb[0].mxu0
        %v552 = vadd.f32 0.0, %v551
        %v553 = vpop.f32.mrb[0].mxu0
        %v554 = vpop.f32.mrb[0].mxu0
        %v555 = vpop.f32.mrb[0].mxu0
        %556 = vdwg.mxu0
        %v575 = vunpack.c.l.b16 %v402
        %v576 = vunpack.c.l.b16 %v403
        %v577 = vunpack.c.l.b16 %v404
        %v578 = vunpack.c.l.b16 %v405
        %v579 = vunpack.c.l.b16 %v406
        %v580 = vunpack.c.l.b16 %v407
        %v581 = vunpack.c.l.b16 %v408
        %v582 = vunpack.c.l.b16 %v409
        %v583 = vunpack.c.l.b16 %v410
        %v584 = vunpack.c.l.b16 %v411
        %v585 = vunpack.c.l.b16 %v412
        %v586 = vunpack.c.l.b16 %v413
        %v587 = vunpack.c.l.b16 %v414
        %v588 = vunpack.c.l.b16 %v415
        %v589 = vunpack.c.l.b16 %v416
        %v590 = vunpack.c.l.b16 %v417
        %v591 = vpack.c.b16 %v576, %v575
        %v592 = vpack.c.b16 %v578, %v577
        %v593 = vpack.c.b16 %v580, %v579
        %v594 = vpack.c.b16 %v582, %v581
        %v595 = vpack.c.b16 %v584, %v583
        %v596 = vpack.c.b16 %v586, %v585
        %v597 = vpack.c.b16 %v588, %v587
        %v598 = vpack.c.b16 %v590, %v589
        %607 = vmatprep.subr.bf16.mxu0 0
        %608 = vmatpush1.bf16.msra.mxu0 %v591
        %609 = vmatprep.subr.bf16.mxu0 0
        %610 = vmatpush1.bf16.msra.mxu0 %v592
        %611 = vmatprep.subr.bf16.mxu0 0
        %612 = vmatpush1.bf16.msra.mxu0 %v593
        %613 = vmatprep.subr.bf16.mxu0 0
        %614 = vmatpush1.bf16.msra.mxu0 %v594
        %615 = vmatprep.subr.bf16.mxu0 0
        %616 = vmatpush1.bf16.msra.mxu0 %v595
        %617 = vmatprep.subr.bf16.mxu0 0
        %618 = vmatpush1.bf16.msra.mxu0 %v596
        %619 = vmatprep.subr.bf16.mxu0 0
        %620 = vmatpush1.bf16.msra.mxu0 %v597
        %621 = vmatprep.subr.bf16.mxu0 0
        %622 = vmatpush1.bf16.msra.mxu0 %v598
        %623 = vmatprep.subr.bf16.mxu0 0
        %624 = vmatpush1.bf16.msra.mxu0 0
        %625 = vmatprep.subr.bf16.mxu0 0
        %626 = vmatpush1.bf16.msra.mxu0 0
        %627 = vmatprep.subr.bf16.mxu0 0
        %628 = vmatpush1.bf16.msra.mxu0 0
        %629 = vmatprep.subr.bf16.mxu0 0
        %630 = vmatpush1.bf16.msra.mxu0 0
        %631 = vmatprep.subr.bf16.mxu0 0
        %632 = vmatpush1.bf16.msra.mxu0 0
        %633 = vmatprep.subr.bf16.mxu0 0
        %634 = vmatpush1.bf16.msra.mxu0 0
        %635 = vmatprep.subr.bf16.mxu0 0
        %636 = vmatpush1.bf16.msra.mxu0 0
        %637 = vmatprep.subr.bf16.mxu0 0
        %638 = vmatpush1.bf16.msra.mxu0 0
        %639 = vmatprep.mubr.bf16.mxu0 0
        %640 = vmatmul.mubr.bf16.gmra.mrb[0].mxu0 %v441
        %v641 = vpop.f32.mrb[0].mxu0
        %v642 = vadd.f32 %v544, %v641
        %v643 = vpop.f32.mrb[0].mxu0
        %v644 = vpop.f32.mrb[0].mxu0
        %v645 = vadd.f32 %v547, %v644
        %v646 = vpop.f32.mrb[0].mxu0
        %647 = vmatprep.mubr.bf16.mxu0 0
        %648 = vmatmul.mubr.bf16.gmra.mrb[0].mxu0 %v442
        %v649 = vpop.f32.mrb[0].mxu0
        %v650 = vadd.f32 %v552, %v649
        %v651 = vpop.f32.mrb[0].mxu0
        %v652 = vpop.f32.mrb[0].mxu0
        %v653 = vpop.f32.mrb[0].mxu0
        %654 = vdwg.mxu0
        %s655 = scalar_lea.vmem [#allocation8], 128
        %v656 = vld [vmem:[%s655] sm:$0xf]
        %v657 = vld [vmem:[%s655 + $0x4] sm:$0xf]
        %v658 = vld [vmem:[%s655 + $0x8] sm:$0xf]
        %v659 = vld [vmem:[%s655 + $0xc] sm:$0xf]
        %v660 = vld [vmem:[%s655 + $0x10] sm:$0xf]
        %v661 = vld [vmem:[%s655 + $0x14] sm:$0xf]
        %v662 = vld [vmem:[%s655 + $0x18] sm:$0xf]
        %v663 = vld [vmem:[%s655 + $0x1c] sm:$0xf]
        %v664 = vld [vmem:[%s655 + $0x20] sm:$0xf]
        %v665 = vld [vmem:[%s655 + $0x24] sm:$0xf]
        %v666 = vld [vmem:[%s655 + $0x28] sm:$0xf]
        %v667 = vld [vmem:[%s655 + $0x2c] sm:$0xf]
        %v668 = vld [vmem:[%s655 + $0x30] sm:$0xf]
        %v669 = vld [vmem:[%s655 + $0x34] sm:$0xf]
        %v670 = vld [vmem:[%s655 + $0x38] sm:$0xf]
        %v671 = vld [vmem:[%s655 + $0x3c] sm:$0xf]
        %vm672 = vcmask 1046528
        %v673 = vrot.slane %v441, 1
        %v674 = vrot.slane %v442, 1
        %v675 = vsel %vm672, %v673, %v674
        %v694 = vunpack.c.l.b16 %v656
        %v695 = vunpack.c.l.b16 %v657
        %v696 = vunpack.c.l.b16 %v658
        %v697 = vunpack.c.l.b16 %v659
        %v698 = vunpack.c.l.b16 %v660
        %v699 = vunpack.c.l.b16 %v661
        %v700 = vunpack.c.l.b16 %v662
        %v701 = vunpack.c.l.b16 %v663
        %v702 = vunpack.c.l.b16 %v664
        %v703 = vunpack.c.l.b16 %v665
        %v704 = vunpack.c.l.b16 %v666
        %v705 = vunpack.c.l.b16 %v667
        %v706 = vunpack.c.l.b16 %v668
        %v707 = vunpack.c.l.b16 %v669
        %v708 = vunpack.c.l.b16 %v670
        %v709 = vunpack.c.l.b16 %v671
        %v710 = vpack.c.b16 %v695, %v694
        %v711 = vpack.c.b16 %v697, %v696
        %v712 = vpack.c.b16 %v699, %v698
        %v713 = vpack.c.b16 %v701, %v700
        %v714 = vpack.c.b16 %v703, %v702
        %v715 = vpack.c.b16 %v705, %v704
        %v716 = vpack.c.b16 %v707, %v706
        %v717 = vpack.c.b16 %v709, %v708
        %726 = vmatprep.subr.bf16.mxu0 0
        %727 = vmatpush1.bf16.msra.mxu0 %v710
        %728 = vmatprep.subr.bf16.mxu0 0
        %729 = vmatpush1.bf16.msra.mxu0 %v711
        %730 = vmatprep.subr.bf16.mxu0 0
        %731 = vmatpush1.bf16.msra.mxu0 %v712
        %732 = vmatprep.subr.bf16.mxu0 0
        %733 = vmatpush1.bf16.msra.mxu0 %v713
        %734 = vmatprep.subr.bf16.mxu0 0
        %735 = vmatpush1.bf16.msra.mxu0 %v714
        %736 = vmatprep.subr.bf16.mxu0 0
        %737 = vmatpush1.bf16.msra.mxu0 %v715
        %738 = vmatprep.subr.bf16.mxu0 0
        %739 = vmatpush1.bf16.msra.mxu0 %v716
        %740 = vmatprep.subr.bf16.mxu0 0
        %741 = vmatpush1.bf16.msra.mxu0 %v717
        %742 = vmatprep.subr.bf16.mxu0 0
        %743 = vmatpush1.bf16.msra.mxu0 0
        %744 = vmatprep.subr.bf16.mxu0 0
        %745 = vmatpush1.bf16.msra.mxu0 0
        %746 = vmatprep.subr.bf16.mxu0 0
        %747 = vmatpush1.bf16.msra.mxu0 0
        %748 = vmatprep.subr.bf16.mxu0 0
        %749 = vmatpush1.bf16.msra.mxu0 0
        %750 = vmatprep.subr.bf16.mxu0 0
        %751 = vmatpush1.bf16.msra.mxu0 0
        %752 = vmatprep.subr.bf16.mxu0 0
        %753 = vmatpush1.bf16.msra.mxu0 0
        %754 = vmatprep.subr.bf16.mxu0 0
        %755 = vmatpush1.bf16.msra.mxu0 0
        %756 = vmatprep.subr.bf16.mxu0 0
        %757 = vmatpush1.bf16.msra.mxu0 0
        %758 = vmatprep.mubr.bf16.mxu0 0
        %759 = vmatmul.mubr.bf16.gmra.mrb[0].mxu0 %v675
        %v760 = vpop.f32.mrb[0].mxu0
        %v761 = vadd.f32 0.0, %v760
        %v762 = vpop.f32.mrb[0].mxu0
        %v763 = vpop.f32.mrb[0].mxu0
        %v764 = vadd.f32 0.0, %v763
        %v765 = vpop.f32.mrb[0].mxu0
        %766 = vmatprep.mubr.bf16.mxu0 0
        %767 = vmatmul.mubr.bf16.gmra.mrb[0].mxu0 %v674
        %v768 = vpop.f32.mrb[0].mxu0
        %v769 = vadd.f32 0.0, %v768
        %v770 = vpop.f32.mrb[0].mxu0
        %v771 = vpop.f32.mrb[0].mxu0
        %v772 = vpop.f32.mrb[0].mxu0
        %773 = vdwg.mxu0
        %v774 = vadd.f32 %v642, %v761
        %v775 = vadd.f32 %v645, %v764
        %v776 = vadd.f32 %v650, %v769
        %v777 = vld [vmem:[%s5] sm:$0x1]
        %v778 = vlaneseq
        %v779 = vshrl.u32 %v778, 7
        %v780 = vsub.s32 0, %v779
        %v781 = vrot.slane %v777, %v780
        %v782 = vadd.f32 %v774, %v781
        %v783 = vadd.f32 %v775, %v781
        %v784 = vadd.f32 %v776, %v781
        %v785 = vmax.f32 %v782, 0.0
        %v786 = vmax.f32 %v783, 0.0
        %v787 = vmax.f32 %v784, 0.0
        %v788 = vlaneseq
        %v789 = vshrl.u32 %v788, 7
        %v790 = vadd.s32 %v789, 8
        %v791 = vadd.s32 %v789, 16
        %s792 = smul.u32 %s32, 16
        %s793 = ssub.s32 %s792, 1
        %v794 = vstv %s793
        %v795 = vadd.s32 %v794, %v789
        %v796 = vadd.s32 %v794, %v790
        %v797 = vadd.s32 %v794, %v791
        %vm798 = vcmp.ge.s32.totalorder %v795, 0
        %vm799 = vcmp.ge.s32.totalorder %v796, 0
        %vm800 = vcmp.ge.s32.totalorder %v797, 0
        %vm801 = vcmp.lt.s32.totalorder %v795, 16
        %vm802 = vcmp.lt.s32.totalorder %v796, 16
        %vm803 = vcmp.lt.s32.totalorder %v797, 16
        %vm804 = vmand %vm798, %vm801
        %vm805 = vmand %vm799, %vm802
        %vm806 = vmand %vm800, %vm803
        %v807 = vsel %vm804, 1, 0
        %v808 = vsel %vm805, 1, 0
        %v809 = vsel %vm806, 1, 0
        %vm810 = vcmp.eq.s32.totalorder %v807, 1
        %vm811 = vcmp.eq.s32.totalorder %v808, 1
        %vm812 = vcmp.eq.s32.totalorder %v809, 1
        %v813 = vsel %vm810, %v785, 0.0
        %v814 = vsel %vm811, %v786, 0.0
        %v815 = vsel %vm812, %v787, 0.0
        %v816 = vpack.c.bf16 %v814, %v813
        %v817 = vpack.c.bf16 %v815, %v815
        %v818 = vld [vmem:[#allocation9] sm:$0xf]
        %v819 = vld [vmem:[#allocation9 + $0x4] sm:$0xf]
        %v820 = vld [vmem:[#allocation9 + $0x8] sm:$0xf]
        %v821 = vld [vmem:[#allocation9 + $0xc] sm:$0xf]
        %v822 = vld [vmem:[#allocation9 + $0x10] sm:$0xf]
        %v823 = vld [vmem:[#allocation9 + $0x14] sm:$0xf]
        %v824 = vld [vmem:[#allocation9 + $0x18] sm:$0xf]
        %v825 = vld [vmem:[#allocation9 + $0x1c] sm:$0xf]
        %v826 = vld [vmem:[#allocation9 + $0x20] sm:$0xf]
        %v827 = vld [vmem:[#allocation9 + $0x24] sm:$0xf]
        %v828 = vld [vmem:[#allocation9 + $0x28] sm:$0xf]
        %v829 = vld [vmem:[#allocation9 + $0x2c] sm:$0xf]
        %v830 = vld [vmem:[#allocation9 + $0x30] sm:$0xf]
        %v831 = vld [vmem:[#allocation9 + $0x34] sm:$0xf]
        %v832 = vld [vmem:[#allocation9 + $0x38] sm:$0xf]
        %v833 = vld [vmem:[#allocation9 + $0x3c] sm:$0xf]
        %s834 = scalar_lea.vmem [#allocation9], 64
        %v835 = vld [vmem:[%s834] sm:$0xf]
        %v836 = vld [vmem:[%s834 + $0x4] sm:$0xf]
        %v837 = vld [vmem:[%s834 + $0x8] sm:$0xf]
        %v838 = vld [vmem:[%s834 + $0xc] sm:$0xf]
        %v839 = vld [vmem:[%s834 + $0x10] sm:$0xf]
        %v840 = vld [vmem:[%s834 + $0x14] sm:$0xf]
        %v841 = vld [vmem:[%s834 + $0x18] sm:$0xf]
        %v842 = vld [vmem:[%s834 + $0x1c] sm:$0xf]
        %v843 = vld [vmem:[%s834 + $0x20] sm:$0xf]
        %v844 = vld [vmem:[%s834 + $0x24] sm:$0xf]
        %v845 = vld [vmem:[%s834 + $0x28] sm:$0xf]
        %v846 = vld [vmem:[%s834 + $0x2c] sm:$0xf]
        %v847 = vld [vmem:[%s834 + $0x30] sm:$0xf]
        %v848 = vld [vmem:[%s834 + $0x34] sm:$0xf]
        %v849 = vld [vmem:[%s834 + $0x38] sm:$0xf]
        %v850 = vld [vmem:[%s834 + $0x3c] sm:$0xf]
        %v852 = vshrl.u32 %v816, 16
        %v854 = vshll.u32 %v816, 16
        %v856 = vrot.slane %v854, 1
        %v857 = vor.u32 %v852, %v856
        %v859 = vshll.u32 %v817, 16
        %v861 = vrot.slane %v859, 1
        %v862 = vsel %vm443, %v857, %v861
        %v880 = vunpack.c.l.b16 %v835
        %v881 = vunpack.c.l.b16 %v836
        %v882 = vunpack.c.l.b16 %v837
        %v883 = vunpack.c.l.b16 %v838
        %v884 = vunpack.c.l.b16 %v839
        %v885 = vunpack.c.l.b16 %v840
        %v886 = vunpack.c.l.b16 %v841
        %v887 = vunpack.c.l.b16 %v842
        %v888 = vunpack.c.l.b16 %v843
        %v889 = vunpack.c.l.b16 %v844
        %v890 = vunpack.c.l.b16 %v845
        %v891 = vunpack.c.l.b16 %v846
        %v892 = vunpack.c.l.b16 %v847
        %v893 = vunpack.c.l.b16 %v848
        %v894 = vunpack.c.l.b16 %v849
        %v895 = vunpack.c.l.b16 %v850
        %v896 = vpack.c.b16 %v881, %v880
        %v897 = vpack.c.b16 %v883, %v882
        %v898 = vpack.c.b16 %v885, %v884
        %v899 = vpack.c.b16 %v887, %v886
        %v900 = vpack.c.b16 %v889, %v888
        %v901 = vpack.c.b16 %v891, %v890
        %v902 = vpack.c.b16 %v893, %v892
        %v903 = vpack.c.b16 %v895, %v894
        %912 = vmatprep.subr.bf16.mxu0 0
        %913 = vmatpush1.bf16.msra.mxu0 %v896
        %914 = vmatprep.subr.bf16.mxu0 0
        %915 = vmatpush1.bf16.msra.mxu0 %v897
        %916 = vmatprep.subr.bf16.mxu0 0
        %917 = vmatpush1.bf16.msra.mxu0 %v898
        %918 = vmatprep.subr.bf16.mxu0 0
        %919 = vmatpush1.bf16.msra.mxu0 %v899
        %920 = vmatprep.subr.bf16.mxu0 0
        %921 = vmatpush1.bf16.msra.mxu0 %v900
        %922 = vmatprep.subr.bf16.mxu0 0
        %923 = vmatpush1.bf16.msra.mxu0 %v901
        %924 = vmatprep.subr.bf16.mxu0 0
        %925 = vmatpush1.bf16.msra.mxu0 %v902
        %926 = vmatprep.subr.bf16.mxu0 0
        %927 = vmatpush1.bf16.msra.mxu0 %v903
        %928 = vmatprep.subr.bf16.mxu0 0
        %929 = vmatpush1.bf16.msra.mxu0 0
        %930 = vmatprep.subr.bf16.mxu0 0
        %931 = vmatpush1.bf16.msra.mxu0 0
        %932 = vmatprep.subr.bf16.mxu0 0
        %933 = vmatpush1.bf16.msra.mxu0 0
        %934 = vmatprep.subr.bf16.mxu0 0
        %935 = vmatpush1.bf16.msra.mxu0 0
        %936 = vmatprep.subr.bf16.mxu0 0
        %937 = vmatpush1.bf16.msra.mxu0 0
        %938 = vmatprep.subr.bf16.mxu0 0
        %939 = vmatpush1.bf16.msra.mxu0 0
        %940 = vmatprep.subr.bf16.mxu0 0
        %941 = vmatpush1.bf16.msra.mxu0 0
        %942 = vmatprep.subr.bf16.mxu0 0
        %943 = vmatpush1.bf16.msra.mxu0 0
        %944 = vmatprep.mubr.bf16.mxu0 0
        %945 = vmatmul.mubr.bf16.gmra.mrb[0].mxu0 %v862
        %v946 = vpop.f32.mrb[0].mxu0
        %v947 = vadd.f32 0.0, %v946
        %v948 = vpop.f32.mrb[0].mxu0
        %v949 = vpop.f32.mrb[0].mxu0
        %v950 = vadd.f32 0.0, %v949
        %v951 = vpop.f32.mrb[0].mxu0
        %952 = vdwg.mxu0
        %v969 = vunpack.c.l.b16 %v818
        %v970 = vunpack.c.l.b16 %v819
        %v971 = vunpack.c.l.b16 %v820
        %v972 = vunpack.c.l.b16 %v821
        %v973 = vunpack.c.l.b16 %v822
        %v974 = vunpack.c.l.b16 %v823
        %v975 = vunpack.c.l.b16 %v824
        %v976 = vunpack.c.l.b16 %v825
        %v977 = vunpack.c.l.b16 %v826
        %v978 = vunpack.c.l.b16 %v827
        %v979 = vunpack.c.l.b16 %v828
        %v980 = vunpack.c.l.b16 %v829
        %v981 = vunpack.c.l.b16 %v830
        %v982 = vunpack.c.l.b16 %v831
        %v983 = vunpack.c.l.b16 %v832
        %v984 = vunpack.c.l.b16 %v833
        %v985 = vpack.c.b16 %v970, %v969
        %v986 = vpack.c.b16 %v972, %v971
        %v987 = vpack.c.b16 %v974, %v973
        %v988 = vpack.c.b16 %v976, %v975
        %v989 = vpack.c.b16 %v978, %v977
        %v990 = vpack.c.b16 %v980, %v979
        %v991 = vpack.c.b16 %v982, %v981
        %v992 = vpack.c.b16 %v984, %v983
        %1001 = vmatprep.subr.bf16.mxu0 0
        %1002 = vmatpush1.bf16.msra.mxu0 %v985
        %1003 = vmatprep.subr.bf16.mxu0 0
        %1004 = vmatpush1.bf16.msra.mxu0 %v986
        %1005 = vmatprep.subr.bf16.mxu0 0
        %1006 = vmatpush1.bf16.msra.mxu0 %v987
        %1007 = vmatprep.subr.bf16.mxu0 0
        %1008 = vmatpush1.bf16.msra.mxu0 %v988
        %1009 = vmatprep.subr.bf16.mxu0 0
        %1010 = vmatpush1.bf16.msra.mxu0 %v989
        %1011 = vmatprep.subr.bf16.mxu0 0
        %1012 = vmatpush1.bf16.msra.mxu0 %v990
        %1013 = vmatprep.subr.bf16.mxu0 0
        %1014 = vmatpush1.bf16.msra.mxu0 %v991
        %1015 = vmatprep.subr.bf16.mxu0 0
        %1016 = vmatpush1.bf16.msra.mxu0 %v992
        %1017 = vmatprep.subr.bf16.mxu0 0
        %1018 = vmatpush1.bf16.msra.mxu0 0
        %1019 = vmatprep.subr.bf16.mxu0 0
        %1020 = vmatpush1.bf16.msra.mxu0 0
        %1021 = vmatprep.subr.bf16.mxu0 0
        %1022 = vmatpush1.bf16.msra.mxu0 0
        %1023 = vmatprep.subr.bf16.mxu0 0
        %1024 = vmatpush1.bf16.msra.mxu0 0
        %1025 = vmatprep.subr.bf16.mxu0 0
        %1026 = vmatpush1.bf16.msra.mxu0 0
        %1027 = vmatprep.subr.bf16.mxu0 0
        %1028 = vmatpush1.bf16.msra.mxu0 0
        %1029 = vmatprep.subr.bf16.mxu0 0
        %1030 = vmatpush1.bf16.msra.mxu0 0
        %1031 = vmatprep.subr.bf16.mxu0 0
        %1032 = vmatpush1.bf16.msra.mxu0 0
        %1033 = vmatprep.mubr.bf16.mxu0 0
        %1034 = vmatmul.mubr.bf16.gmra.mrb[0].mxu0 %v816
        %v1035 = vpop.f32.mrb[0].mxu0
        %v1036 = vadd.f32 %v947, %v1035
        %v1037 = vpop.f32.mrb[0].mxu0
        %v1038 = vpop.f32.mrb[0].mxu0
        %v1039 = vadd.f32 %v950, %v1038
        %v1040 = vpop.f32.mrb[0].mxu0
        %1041 = vdwg.mxu0
        %s1042 = scalar_lea.vmem [#allocation9], 128
        %v1043 = vld [vmem:[%s1042] sm:$0xf]
        %v1044 = vld [vmem:[%s1042 + $0x4] sm:$0xf]
        %v1045 = vld [vmem:[%s1042 + $0x8] sm:$0xf]
        %v1046 = vld [vmem:[%s1042 + $0xc] sm:$0xf]
        %v1047 = vld [vmem:[%s1042 + $0x10] sm:$0xf]
        %v1048 = vld [vmem:[%s1042 + $0x14] sm:$0xf]
        %v1049 = vld [vmem:[%s1042 + $0x18] sm:$0xf]
        %v1050 = vld [vmem:[%s1042 + $0x1c] sm:$0xf]
        %v1051 = vld [vmem:[%s1042 + $0x20] sm:$0xf]
        %v1052 = vld [vmem:[%s1042 + $0x24] sm:$0xf]
        %v1053 = vld [vmem:[%s1042 + $0x28] sm:$0xf]
        %v1054 = vld [vmem:[%s1042 + $0x2c] sm:$0xf]
        %v1055 = vld [vmem:[%s1042 + $0x30] sm:$0xf]
        %v1056 = vld [vmem:[%s1042 + $0x34] sm:$0xf]
        %v1057 = vld [vmem:[%s1042 + $0x38] sm:$0xf]
        %v1058 = vld [vmem:[%s1042 + $0x3c] sm:$0xf]
        %v1061 = vrot.slane %v816, 1
        %v1062 = vrot.slane %v817, 1
        %v1063 = vsel %vm672, %v1061, %v1062
        %v1081 = vunpack.c.l.b16 %v1043
        %v1082 = vunpack.c.l.b16 %v1044
        %v1083 = vunpack.c.l.b16 %v1045
        %v1084 = vunpack.c.l.b16 %v1046
        %v1085 = vunpack.c.l.b16 %v1047
        %v1086 = vunpack.c.l.b16 %v1048
        %v1087 = vunpack.c.l.b16 %v1049
        %v1088 = vunpack.c.l.b16 %v1050
        %v1089 = vunpack.c.l.b16 %v1051
        %v1090 = vunpack.c.l.b16 %v1052
        %v1091 = vunpack.c.l.b16 %v1053
        %v1092 = vunpack.c.l.b16 %v1054
        %v1093 = vunpack.c.l.b16 %v1055
        %v1094 = vunpack.c.l.b16 %v1056
        %v1095 = vunpack.c.l.b16 %v1057
        %v1096 = vunpack.c.l.b16 %v1058
        %v1097 = vpack.c.b16 %v1082, %v1081
        %v1098 = vpack.c.b16 %v1084, %v1083
        %v1099 = vpack.c.b16 %v1086, %v1085
        %v1100 = vpack.c.b16 %v1088, %v1087
        %v1101 = vpack.c.b16 %v1090, %v1089
        %v1102 = vpack.c.b16 %v1092, %v1091
        %v1103 = vpack.c.b16 %v1094, %v1093
        %v1104 = vpack.c.b16 %v1096, %v1095
        %1113 = vmatprep.subr.bf16.mxu0 0
        %1114 = vmatpush1.bf16.msra.mxu0 %v1097
        %1115 = vmatprep.subr.bf16.mxu0 0
        %1116 = vmatpush1.bf16.msra.mxu0 %v1098
        %1117 = vmatprep.subr.bf16.mxu0 0
        %1118 = vmatpush1.bf16.msra.mxu0 %v1099
        %1119 = vmatprep.subr.bf16.mxu0 0
        %1120 = vmatpush1.bf16.msra.mxu0 %v1100
        %1121 = vmatprep.subr.bf16.mxu0 0
        %1122 = vmatpush1.bf16.msra.mxu0 %v1101
        %1123 = vmatprep.subr.bf16.mxu0 0
        %1124 = vmatpush1.bf16.msra.mxu0 %v1102
        %1125 = vmatprep.subr.bf16.mxu0 0
        %1126 = vmatpush1.bf16.msra.mxu0 %v1103
        %1127 = vmatprep.subr.bf16.mxu0 0
        %1128 = vmatpush1.bf16.msra.mxu0 %v1104
        %1129 = vmatprep.subr.bf16.mxu0 0
        %1130 = vmatpush1.bf16.msra.mxu0 0
        %1131 = vmatprep.subr.bf16.mxu0 0
        %1132 = vmatpush1.bf16.msra.mxu0 0
        %1133 = vmatprep.subr.bf16.mxu0 0
        %1134 = vmatpush1.bf16.msra.mxu0 0
        %1135 = vmatprep.subr.bf16.mxu0 0
        %1136 = vmatpush1.bf16.msra.mxu0 0
        %1137 = vmatprep.subr.bf16.mxu0 0
        %1138 = vmatpush1.bf16.msra.mxu0 0
        %1139 = vmatprep.subr.bf16.mxu0 0
        %1140 = vmatpush1.bf16.msra.mxu0 0
        %1141 = vmatprep.subr.bf16.mxu0 0
        %1142 = vmatpush1.bf16.msra.mxu0 0
        %1143 = vmatprep.subr.bf16.mxu0 0
        %1144 = vmatpush1.bf16.msra.mxu0 0
        %1145 = vmatprep.mubr.bf16.mxu0 0
        %1146 = vmatmul.mubr.bf16.gmra.mrb[0].mxu0 %v1063
        %v1147 = vpop.f32.mrb[0].mxu0
        %v1148 = vadd.f32 0.0, %v1147
        %v1149 = vpop.f32.mrb[0].mxu0
        %v1150 = vpop.f32.mrb[0].mxu0
        %v1151 = vadd.f32 0.0, %v1150
        %v1152 = vpop.f32.mrb[0].mxu0
        %1153 = vdwg.mxu0
        %v1154 = vadd.f32 %v1036, %v1148
        %v1155 = vadd.f32 %v1039, %v1151
        %v1156 = vld [vmem:[%s5 + $0x1] sm:$0x1]
        %v1157 = vlaneseq
        %v1158 = vshrl.u32 %v1157, 7
        %v1159 = vsub.s32 0, %v1158
        %v1160 = vrot.slane %v1156, %v1159
        %v1161 = vadd.f32 %v1154, %v1160
        %v1162 = vadd.f32 %v1155, %v1160
        %v1163 = vld [vmem:[#allocation11] sm:$0xf]
        %v1164 = vld [vmem:[#allocation11 + $0x4] sm:$0xf]
        %v1165 = vld [vmem:[#allocation11 + $0x8] sm:$0xf]
        %v1166 = vld [vmem:[#allocation11 + $0xc] sm:$0xf]
        %v1167 = vld [vmem:[#allocation11 + $0x10] sm:$0xf]
        %v1168 = vld [vmem:[#allocation11 + $0x14] sm:$0xf]
        %v1169 = vld [vmem:[#allocation11 + $0x18] sm:$0xf]
        %v1170 = vld [vmem:[#allocation11 + $0x1c] sm:$0xf]
        %v1171 = vld [vmem:[#allocation11 + $0x20] sm:$0xf]
        %v1172 = vld [vmem:[#allocation11 + $0x24] sm:$0xf]
        %v1173 = vld [vmem:[#allocation11 + $0x28] sm:$0xf]
        %v1174 = vld [vmem:[#allocation11 + $0x2c] sm:$0xf]
        %v1175 = vld [vmem:[#allocation11 + $0x30] sm:$0xf]
        %v1176 = vld [vmem:[#allocation11 + $0x34] sm:$0xf]
        %v1177 = vld [vmem:[#allocation11 + $0x38] sm:$0xf]
        %v1178 = vld [vmem:[#allocation11 + $0x3c] sm:$0xf]
        %v1179 = vld [vmem:[%s5 + $0x2] sm:$0x1]
        %v1180 = vlaneseq
        %v1181 = vshrl.u32 %v1180, 7
        %v1182 = vsub.s32 0, %v1181
        %v1183 = vrot.slane %v1179, %v1182
        %v1200 = vunpack.c.l.b16 %v1163
        %v1201 = vunpack.c.l.b16 %v1164
        %v1202 = vunpack.c.l.b16 %v1165
        %v1203 = vunpack.c.l.b16 %v1166
        %v1204 = vunpack.c.l.b16 %v1167
        %v1205 = vunpack.c.l.b16 %v1168
        %v1206 = vunpack.c.l.b16 %v1169
        %v1207 = vunpack.c.l.b16 %v1170
        %v1208 = vunpack.c.l.b16 %v1171
        %v1209 = vunpack.c.l.b16 %v1172
        %v1210 = vunpack.c.l.b16 %v1173
        %v1211 = vunpack.c.l.b16 %v1174
        %v1212 = vunpack.c.l.b16 %v1175
        %v1213 = vunpack.c.l.b16 %v1176
        %v1214 = vunpack.c.l.b16 %v1177
        %v1215 = vunpack.c.l.b16 %v1178
        %v1216 = vpack.c.b16 %v1201, %v1200
        %v1217 = vpack.c.b16 %v1203, %v1202
        %v1218 = vpack.c.b16 %v1205, %v1204
        %v1219 = vpack.c.b16 %v1207, %v1206
        %v1220 = vpack.c.b16 %v1209, %v1208
        %v1221 = vpack.c.b16 %v1211, %v1210
        %v1222 = vpack.c.b16 %v1213, %v1212
        %v1223 = vpack.c.b16 %v1215, %v1214
        %1232 = vmatprep.subr.bf16.mxu0 0
        %1233 = vmatpush1.bf16.msra.mxu0 %v1216
        %1234 = vmatprep.subr.bf16.mxu0 0
        %1235 = vmatpush1.bf16.msra.mxu0 %v1217
        %1236 = vmatprep.subr.bf16.mxu0 0
        %1237 = vmatpush1.bf16.msra.mxu0 %v1218
        %1238 = vmatprep.subr.bf16.mxu0 0
        %1239 = vmatpush1.bf16.msra.mxu0 %v1219
        %1240 = vmatprep.subr.bf16.mxu0 0
        %1241 = vmatpush1.bf16.msra.mxu0 %v1220
        %1242 = vmatprep.subr.bf16.mxu0 0
        %1243 = vmatpush1.bf16.msra.mxu0 %v1221
        %1244 = vmatprep.subr.bf16.mxu0 0
        %1245 = vmatpush1.bf16.msra.mxu0 %v1222
        %1246 = vmatprep.subr.bf16.mxu0 0
        %1247 = vmatpush1.bf16.msra.mxu0 %v1223
        %1248 = vmatprep.subr.bf16.mxu0 0
        %1249 = vmatpush1.bf16.msra.mxu0 0
        %1250 = vmatprep.subr.bf16.mxu0 0
        %1251 = vmatpush1.bf16.msra.mxu0 0
        %1252 = vmatprep.subr.bf16.mxu0 0
        %1253 = vmatpush1.bf16.msra.mxu0 0
        %1254 = vmatprep.subr.bf16.mxu0 0
        %1255 = vmatpush1.bf16.msra.mxu0 0
        %1256 = vmatprep.subr.bf16.mxu0 0
        %1257 = vmatpush1.bf16.msra.mxu0 0
        %1258 = vmatprep.subr.bf16.mxu0 0
        %1259 = vmatpush1.bf16.msra.mxu0 0
        %1260 = vmatprep.subr.bf16.mxu0 0
        %1261 = vmatpush1.bf16.msra.mxu0 0
        %1262 = vmatprep.subr.bf16.mxu0 0
        %1263 = vmatpush1.bf16.msra.mxu0 0
        %1264 = vmatprep.mubr.bf16.mxu0 0
        %1265 = vmatmul.mubr.bf16.gmra.mrb[0].mxu0 %v675
        %v1266 = vpop.f32.mrb[0].mxu0
        %v1267 = vadd.f32 %v1183, %v1266
        %v1268 = vpop.f32.mrb[0].mxu0
        %v1269 = vpop.f32.mrb[0].mxu0
        %v1270 = vadd.f32 %v1183, %v1269
        %v1271 = vpop.f32.mrb[0].mxu0
        %1272 = vdwg.mxu0
        %v1273 = vadd.f32 %v1161, %v1267
        %v1274 = vadd.f32 %v1162, %v1270
        %v1275 = vmax.f32 %v1273, 0.0
        %v1276 = vmax.f32 %v1274, 0.0
        %1277 = vst [vmem:[%s383] sm:$0xff] %v1275
        %1278 = vst [vmem:[%s383 + $0x8] sm:$0xff] %v1276
        %s1279 = sand.u32 %s193, 1
        %s1280 = scalar_lea.sflag [#allocation5], %s1279
        %s1281 = sand.u32 %s193, 1
        %s1282 = smul.addr %s1281, 16
        %s1283 = scalar_lea.vmem [#allocation12], %s1282
        // Predicated region
        $region65: #{tpu_custom_call.1} parent=43 // pred_check
          %p1284 = pneg %p203
        $region66: #{tpu_custom_call.1} parent=43 // pred_check_branch
          %1286 = sbr.rel (%p1284) target = $region68
        $region67: #{tpu_custom_call.1} parent=43 // pred_region
          %s1287 = smul.u32 2, %s32
          %s1289 = ssub.s32 256, 256
          %1290 = vsyncadd %s1280, %s1289
          %s1291 = smul.addr %s31, 2
          %s1292 = sadd.s32 %s1287, %s1291
          %s1293 = smul.addr %s1292, 128
          %s1294 = scalar_lea.hbm %s6, %s1293
          %s1295 = sshll.u32 %s1283, 4
          %s1296 = int_to_ptr.vmem [resolvable:$true] %s1295
          %1301 = dma.vmem_to_hbm [thread:$0]  %s1296, 256, %s1294, %s1280, 128, 128, 8
        $region68: #{tpu_custom_call.1} parent=43 // pred_fallthru
          _
      $region44: #{tpu_custom_call.1} parent=5 // pred_fallthru
        _
      %p1302 = scmp.le.s32.totalorder 2, %s22
      // Predicated region
      $region69: #{tpu_custom_call.1} parent=5 // pred_check
        %p1303 = pneg %p1302
      $region70: #{tpu_custom_call.1} parent=5 // pred_check_branch
        %1305 = sbr.rel (%p1303) target = $region72
      $region71: #{tpu_custom_call.1} parent=5 // pred_region
        %s1306 = ssub.s32 %s22, 2
        // Predicated region
        $region73: #{tpu_custom_call.1} parent=71 // pred_check
          %p1307 = pneg %p209
        $region74: #{tpu_custom_call.1} parent=71 // pred_check_branch
          %1309 = sbr.rel (%p1307) target = $region76
        $region75: #{tpu_custom_call.1} parent=71 // pred_region
          %s1310 = sand.u32 %s194, 1
          %s1311 = scalar_lea.sflag [#allocation5], %s1310
          %s1312 = sand.u32 %s194, 1
          %s1313 = smul.addr %s1312, 16
          %s1314 = scalar_lea.vmem [#allocation12], %s1313
          %1315 = dma.done %s1311, 256
        $region76: #{tpu_custom_call.1} parent=71 // pred_fallthru
          _
      $region72: #{tpu_custom_call.1} parent=5 // pred_fallthru
        _
    $region6: #{tpu_custom_call.1} parent=1 // loop_footer
      %s26 = sadd.s32 1, %s22
    $region7: #{tpu_custom_call.1} parent=1 // loop_footer_branch
      %21 = sbr.rel target = $region3
    $region8: #{tpu_custom_call.1} parent=1 // loop_exit
      _
    %1316 = vsyncpa [#allocation4], 1
    %s1317 = scalar_lea.sflag [#allocation4], 1
    %1318 = vsyncpa %s1317, 1
    %1319 = vsyncpa [#allocation7], 1
    %s1320 = scalar_lea.sflag [#allocation7], 1
    %1321 = vsyncpa %s1320, 1
    %1322 = vsyncpa [#allocation10], 1
    %1323 = vsyncpa [#allocation5], 1
    %s1324 = scalar_lea.sflag [#allocation5], 1
    %1325 = vsyncpa %s1324, 1

</llo_original>
